<compile_context>
chip_gen: v5e
topology: v5e:2x2
jax: 0.10.0
libtpu: 0.0.40
codegen_flags: <defaults>
</compile_context>

<pallas_src>
import jax
import jax.numpy as jnp
from jax.experimental import pallas as pl
from jax.experimental.pallas import tpu as pltpu


def _down_kernel(x_ref, w_ref, b_ref, o_ref):
    # x_ref: (1, Hs, Ws, 4*Cin)  space-to-depth input for one batch element
    # w_ref: (4, 4*Cin, TN)      per-shift im2col weights (phase-major K, zero-padded)
    # b_ref: (1, TN)             bias (zero-padded to TN)
    # o_ref: (1, Ho*Wo, TN)      flat, lane-dense output slab (Wo padded to mult of 8)
    hs, ws, c4 = x_ref.shape[1], x_ref.shape[2], x_ref.shape[3]
    ho, wo = hs - 1, ws - 1
    m = ho * wo
    tn = o_ref.shape[-1]
    cin = c4 // 4

    # Per-shift contraction lengths.  Phase blocks whose weights are identically zero
    # are dropped where they are channel-contiguous:
    #   shift (0,0): phases (0,0),(0,1),(1,0),(1,1) nonzero -> K = 4*Cin
    #   shift (0,1): phases (0,0),(1,0) nonzero (gap)       -> K = 4*Cin (keep zeros)
    #   shift (1,0): phases (0,0),(0,1) nonzero             -> K = 2*Cin
    #   shift (1,1): phase  (0,0) nonzero                   -> K = Cin
    shifts = ((0, 0, c4), (0, 1, c4), (1, 0, 2 * cin), (1, 1, cin))

    # Accumulator initialized with the broadcast bias (no separate bias pass).
    acc = jnp.broadcast_to(b_ref[...].astype(jnp.float32), (m, tn))
    for s, (di, dj, k) in enumerate(shifts):
        # Contiguous (unstrided) shifted view; Wo % 8 == 0 -> layout-trivial flatten.
        tap = x_ref[0, di:di + ho, dj:dj + wo, :k].reshape(m, k)
        acc = acc + jnp.dot(tap, w_ref[s, :k, :], preferred_element_type=jnp.float32)

    o_ref[0] = acc.astype(o_ref.dtype)


def downsample_conv(x_nchw, weight_oihw, bias):
    """Conv2d(kernel=3, stride=2, padding=1) — PyTorch-equivalent forward.

    x_nchw:      (B, Cin, H, W)    float32
    weight_oihw: (Cout, Cin, 3, 3) float32 (PyTorch layout)
    bias:        (Cout,)           float32
    returns:     (B, Cout, Ho, Wo) float32, Ho = floor((H-1)/2)+1, same for Wo.
    """
    B, Cin, H, W = x_nchw.shape
    Cout = weight_oihw.shape[0]
    dtype = x_nchw.dtype
    itemsize = jnp.dtype(dtype).itemsize

    LANE = 128
    Cout_p = pl.cdiv(Cout, LANE) * LANE

    # Collapse the Cout-tile axis whenever the (double-buffered) weights are small;
    # otherwise use the native 256-wide MXU tile (v6e/v7x), else 128.
    w_bytes = 16 * Cin * Cout_p * itemsize
    if 2 * w_bytes <= (8 << 20):
        TN = Cout_p
    elif Cout_p % 256 == 0:
        TN = 256
    else:
        TN = 128
    n_tiles = Cout_p // TN

    # Output extents (PyTorch semantics) and padded extents:
    #  * Wo padded to a multiple of 8 so the in-kernel flatten is layout-trivial,
    #  * s2d extents Hs = Ho + 1, Ws = Wo_p + 1 (odd H/W handled by extra zero rows/cols
    #    that only ever meet zero weights or get sliced off the output).
    Ho = (H - 1) // 2 + 1
    Wo = (W - 1) // 2 + 1
    Wo_p = pl.cdiv(Wo, 8) * 8
    Hs = Ho + 1
    Ws = Wo_p + 1
    pb = 2 * Hs - H - 1          # bottom zero-pad rows   (>= 1, includes conv pad)
    pr = 2 * Ws - W - 1          # right  zero-pad cols   (>= 1, includes conv pad)
    C4 = 4 * Cin
    M = Ho * Wo_p

    # ---------------- wrapper glue (fused by XLA around the custom call) ------------
    # NCHW -> NHWC, spatial zero-pad, then space-to-depth:
    # channel index = (ph*2 + pw)*Cin + c, ph/pw = row/col parity within each 2x2 cell.
    x_nhwc = jnp.transpose(x_nchw, (0, 2, 3, 1))
    x_pad = jnp.pad(x_nhwc, ((0, 0), (1, pb), (1, pr), (0, 0)))
    x_s2d = (
        x_pad.reshape(B, Hs, 2, Ws, 2, Cin)
        .transpose(0, 1, 3, 2, 4, 5)
        .reshape(B, Hs, Ws, C4)
    )

    # Per-shift im2col weights: shift s = di*2 + dj, K index = (ph*2+pw)*Cin + c,
    # tap (kh,kw) -> shift (kh//2, kw//2), phase (kh%2, kw%2). Missing taps stay zero.
    w_hwio = jnp.transpose(weight_oihw, (2, 3, 1, 0)).astype(dtype)   # (3,3,Cin,Cout)
    w_big = jnp.zeros((2, 2, 2, 2, Cin, Cout_p), dtype)
    for kh in range(3):
        for kw in range(3):
            w_big = w_big.at[kh // 2, kw // 2, kh % 2, kw % 2, :, :Cout].set(
                w_hwio[kh, kw]
            )
    w_shift = w_big.reshape(4, C4, Cout_p)                            # (4, 4*Cin, Cout_p)
    b_pad = jnp.zeros((1, Cout_p), dtype).at[0, :Cout].set(bias.astype(dtype))

    # Honest cost: pruned MXU FLOPs (11*Cin of the 16*Cin K-slots are nonzero) and
    # weight bytes counted per re-fetch (once total when the Cout axis is collapsed,
    # otherwise once per batch element since the weight block changes every step).
    k_total = 11 * Cin
    w_fetches = 1 if n_tiles == 1 else B
    cost = pl.CostEstimate(
        flops=2 * B * M * k_total * Cout_p,
        transcendentals=0,
        bytes_accessed=(
            x_s2d.size + w_fetches * w_shift.size + b_pad.size + B * M * Cout_p
        ) * itemsize,
    )

    out_flat = pl.pallas_call(
        _down_kernel,
        out_shape=jax.ShapeDtypeStruct((B, M, Cout_p), dtype),
        grid_spec=pltpu.PrefetchScalarGridSpec(
            num_scalar_prefetch=0,
            grid=(B, n_tiles),
            in_specs=[
                pl.BlockSpec((1, Hs, Ws, C4), lambda b, n: (b, 0, 0, 0)),
                pl.BlockSpec((4, C4, TN), lambda b, n: (0, 0, n)),
                pl.BlockSpec((1, TN), lambda b, n: (0, n)),
            ],
            out_specs=pl.BlockSpec((1, M, TN), lambda b, n: (b, 0, n)),
        ),
        compiler_params=pltpu.CompilerParams(
            dimension_semantics=("parallel", "parallel"),
        ),
        cost_estimate=cost,
    )(x_s2d, w_shift, b_pad)

    out = out_flat.reshape(B, Ho, Wo_p, Cout_p)[:, :, :Wo, :Cout]
    return jnp.transpose(out, (0, 3, 1, 2))                           # (B, Cout, Ho, Wo)


if __name__ == "__main__":
    key = jax.random.PRNGKey(0)
    kx, kw, kb = jax.random.split(key, 3)

    B, Cin, H, W = 2, 4, 16, 16
    Cout = 8

    x = jax.random.normal(kx, (B, Cin, H, W), dtype=jnp.float32)
    # Deterministic synthetic parameters (same shapes as nn.Conv2d(Cin, Cout, 3, 2, 1)).
    weight = jax.random.normal(kw, (Cout, Cin, 3, 3), dtype=jnp.float32) * 0.1
    bias = jax.random.normal(kb, (Cout,), dtype=jnp.float32) * 0.1

    down = jax.jit(downsample_conv)
    out = jax.block_until_ready(down(x, weight, bias))

    # Sanity check against XLA's conv (same semantics as PyTorch Conv2d).
    ref = jax.lax.conv_general_dilated(
        x, weight,
        window_strides=(2, 2),
        padding=((1, 1), (1, 1)),
        dimension_numbers=("NCHW", "OIHW", "NCHW"),
    ) + bias.reshape(1, Cout, 1, 1)
    ref = jax.block_until_ready(ref)

    assert out.shape == (B, Cout, 8, 8), out.shape
    assert jnp.allclose(out, ref, atol=1e-4, rtol=1e-4), float(jnp.max(jnp.abs(out - ref)))

    print("KERNEL_OK")
</pallas_src>

<mosaic_0001>
module attributes {stable_mosaic.version = 11 : i64} {
  func.func @_down_kernel(%arg0: i32, %arg1: i32, %arg2: memref<1x9x9x16xf32, #tpu.memory_space<vmem>>, %arg3: memref<4x16x128xf32, #tpu.memory_space<vmem>>, %arg4: memref<1x128xf32, #tpu.memory_space<vmem>>, %arg5: memref<1x64x128xf32, #tpu.memory_space<vmem>>) attributes {dimension_semantics = [#tpu.dimension_semantics<parallel>, #tpu.dimension_semantics<parallel>], iteration_bounds = array<i64: 2, 1>, scalar_prefetch = 0 : i64, scratch_operands = 0 : i64, tpu.core_type = #tpu.core_type<tc>, window_params = [{transform_indices = @transform_0, window_bounds = array<i64: 1, 9, 9, 16>}, {transform_indices = @transform_1, window_bounds = array<i64: 4, 16, 128>}, {transform_indices = @transform_2, window_bounds = array<i64: 1, 128>}, {transform_indices = @transform_3, window_bounds = array<i64: 1, 64, 128>}]} {
    %c0 = arith.constant 0 : index
    %c0_0 = arith.constant 0 : index
    %0 = vector.load %arg4[%c0, %c0_0] : memref<1x128xf32, #tpu.memory_space<vmem>>, vector<1x128xf32>
    %1 = vector.shape_cast %0 : vector<1x128xf32> to vector<1x128xf32>
    %2 = vector.broadcast %1 : vector<1x128xf32> to vector<64x128xf32>
    %c0_1 = arith.constant 0 : index
    %c0_2 = arith.constant 0 : index
    %c0_3 = arith.constant 0 : index
    %c0_4 = arith.constant 0 : index
    %3 = vector.load %arg2[%c0_1, %c0_2, %c0_3, %c0_4] : memref<1x9x9x16xf32, #tpu.memory_space<vmem>>, vector<1x8x8x16xf32>
    %4 = vector.shape_cast %3 : vector<1x8x8x16xf32> to vector<8x8x16xf32>
    %5 = vector.shape_cast %4 : vector<8x8x16xf32> to vector<64x16xf32>
    %c0_5 = arith.constant 0 : index
    %c0_6 = arith.constant 0 : index
    %c0_7 = arith.constant 0 : index
    %6 = vector.load %arg3[%c0_5, %c0_6, %c0_7] : memref<4x16x128xf32, #tpu.memory_space<vmem>>, vector<1x16x128xf32>
    %7 = vector.shape_cast %6 : vector<1x16x128xf32> to vector<16x128xf32>
    %cst = arith.constant dense<0.000000e+00> : vector<64x128xf32>
    %8 = tpu.matmul %5, %7, %cst {dimension_numbers = #tpu.dot_dimension_numbers<[1], [0], [0], [1], [0, 0, 1, 1], [], []>} : vector<64x16xf32>, vector<16x128xf32>, vector<64x128xf32> -> vector<64x128xf32>
    %9 = arith.addf %2, %8 : vector<64x128xf32>
    %c0_8 = arith.constant 0 : index
    %c0_9 = arith.constant 0 : index
    %c1 = arith.constant 1 : index
    %c0_10 = arith.constant 0 : index
    %10 = vector.load %arg2[%c0_8, %c0_9, %c1, %c0_10] : memref<1x9x9x16xf32, #tpu.memory_space<vmem>>, vector<1x8x8x16xf32>
    %11 = vector.shape_cast %10 : vector<1x8x8x16xf32> to vector<8x8x16xf32>
    %12 = vector.shape_cast %11 : vector<8x8x16xf32> to vector<64x16xf32>
    %c1_11 = arith.constant 1 : index
    %c0_12 = arith.constant 0 : index
    %c0_13 = arith.constant 0 : index
    %13 = vector.load %arg3[%c1_11, %c0_12, %c0_13] : memref<4x16x128xf32, #tpu.memory_space<vmem>>, vector<1x16x128xf32>
    %14 = vector.shape_cast %13 : vector<1x16x128xf32> to vector<16x128xf32>
    %cst_14 = arith.constant dense<0.000000e+00> : vector<64x128xf32>
    %15 = tpu.matmul %12, %14, %cst_14 {dimension_numbers = #tpu.dot_dimension_numbers<[1], [0], [0], [1], [0, 0, 1, 1], [], []>} : vector<64x16xf32>, vector<16x128xf32>, vector<64x128xf32> -> vector<64x128xf32>
    %16 = arith.addf %9, %15 : vector<64x128xf32>
    %c0_15 = arith.constant 0 : index
    %c1_16 = arith.constant 1 : index
    %c0_17 = arith.constant 0 : index
    %c0_18 = arith.constant 0 : index
    %17 = vector.load %arg2[%c0_15, %c1_16, %c0_17, %c0_18] : memref<1x9x9x16xf32, #tpu.memory_space<vmem>>, vector<1x8x8x8xf32>
    %18 = vector.shape_cast %17 : vector<1x8x8x8xf32> to vector<8x8x8xf32>
    %19 = vector.shape_cast %18 : vector<8x8x8xf32> to vector<64x8xf32>
    %c2 = arith.constant 2 : index
    %c0_19 = arith.constant 0 : index
    %c0_20 = arith.constant 0 : index
    %20 = vector.load %arg3[%c2, %c0_19, %c0_20] : memref<4x16x128xf32, #tpu.memory_space<vmem>>, vector<1x8x128xf32>
    %21 = vector.shape_cast %20 : vector<1x8x128xf32> to vector<8x128xf32>
    %cst_21 = arith.constant dense<0.000000e+00> : vector<64x128xf32>
    %22 = tpu.matmul %19, %21, %cst_21 {dimension_numbers = #tpu.dot_dimension_numbers<[1], [0], [0], [1], [0, 0, 1, 1], [], []>} : vector<64x8xf32>, vector<8x128xf32>, vector<64x128xf32> -> vector<64x128xf32>
    %23 = arith.addf %16, %22 : vector<64x128xf32>
    %c0_22 = arith.constant 0 : index
    %c1_23 = arith.constant 1 : index
    %c1_24 = arith.constant 1 : index
    %c0_25 = arith.constant 0 : index
    %24 = vector.load %arg2[%c0_22, %c1_23, %c1_24, %c0_25] : memref<1x9x9x16xf32, #tpu.memory_space<vmem>>, vector<1x8x8x4xf32>
    %25 = vector.shape_cast %24 : vector<1x8x8x4xf32> to vector<8x8x4xf32>
    %26 = vector.shape_cast %25 : vector<8x8x4xf32> to vector<64x4xf32>
    %c3 = arith.constant 3 : index
    %c0_26 = arith.constant 0 : index
    %c0_27 = arith.constant 0 : index
    %27 = vector.load %arg3[%c3, %c0_26, %c0_27] : memref<4x16x128xf32, #tpu.memory_space<vmem>>, vector<1x4x128xf32>
    %28 = vector.shape_cast %27 : vector<1x4x128xf32> to vector<4x128xf32>
    %cst_28 = arith.constant dense<0.000000e+00> : vector<64x128xf32>
    %29 = tpu.matmul %26, %28, %cst_28 {dimension_numbers = #tpu.dot_dimension_numbers<[1], [0], [0], [1], [0, 0, 1, 1], [], []>} : vector<64x4xf32>, vector<4x128xf32>, vector<64x128xf32> -> vector<64x128xf32>
    %30 = arith.addf %23, %29 : vector<64x128xf32>
    %c0_29 = arith.constant 0 : index
    %c0_30 = arith.constant 0 : index
    %c0_31 = arith.constant 0 : index
    %31 = vector.load %arg5[%c0_29, %c0_30, %c0_31] : memref<1x64x128xf32, #tpu.memory_space<vmem>>, vector<1x64x128xf32>
    %32 = vector.shape_cast %31 : vector<1x64x128xf32> to vector<64x128xf32>
    %33 = vector.shape_cast %30 : vector<64x128xf32> to vector<1x64x128xf32>
    tpu.vector_store %arg5[%c0_29, %c0_30, %c0_31], %33 {strides = array<i32>} : memref<1x64x128xf32, #tpu.memory_space<vmem>>, vector<1x64x128xf32>,
    return
  }
  func.func @transform_0(%arg0: i32, %arg1: i32) -> (i32, i32, i32, i32) {
    %c0_i32 = arith.constant 0 : i32
    %c0_i32_0 = arith.constant 0 : i32
    %c0_i32_1 = arith.constant 0 : i32
    %c0_i32_2 = arith.constant 0 : i32
    return %arg0, %c0_i32, %c0_i32_0, %c0_i32_1 : i32, i32, i32, i32
  }
  func.func @transform_1(%arg0: i32, %arg1: i32) -> (i32, i32, i32) {
    %c0_i32 = arith.constant 0 : i32
    %c0_i32_0 = arith.constant 0 : i32
    %c0_i32_1 = arith.constant 0 : i32
    return %c0_i32, %c0_i32_0, %arg1 : i32, i32, i32
  }
  func.func @transform_2(%arg0: i32, %arg1: i32) -> (i32, i32) {
    %c0_i32 = arith.constant 0 : i32
    %c0_i32_0 = arith.constant 0 : i32
    return %c0_i32, %arg1 : i32, i32
  }
  func.func @transform_3(%arg0: i32, %arg1: i32) -> (i32, i32, i32) {
    %c0_i32 = arith.constant 0 : i32
    %c0_i32_0 = arith.constant 0 : i32
    return %arg0, %c0_i32, %arg1 : i32, i32, i32
  }
}

</mosaic_0001>

<llo_original>
// kernel: downsample_conv.1
$region0: #{downsample_conv.1}
  #allocation0 [shape = 'u32[]', space=smem, size = 0x4, offset = 0x4, fixed_abs, tag = 'smem constant byte address 0x4 - core index']
  #allocation1 [shape = 'u32[72,128]{1,0:T(1,128)}', space=vmem, size = 0x9000, scoped, tag = 'internal scratch']
  %s0 = inlined_call_operand.vmem [shape: f32[2,9,9,16], index: 0, kind: input, shape index: {}]
  %s1 = inlined_call_operand.vmem [shape: f32[4,16,128], index: 1, kind: input, shape index: {}]
  %s2 = inlined_call_operand.vmem [shape: f32[1,128], index: 2, kind: input, shape index: {}]
  %s3 = inlined_call_operand.vmem [shape: f32[2,64,128], index: 3, kind: output, shape index: {}]
  %s4 = sld [smem:[#allocation0]]
  $region45: #{downsample_conv.1} parent=0
    _
  %s6 = ssub.s32 1, %s4
  %s7 = scalar_select 0, %s6, %s4
  loop: start=0, step=1, limit=4
  $region2: #{downsample_conv.1} parent=0 // loop_pre_header
    _
  $region3: #{downsample_conv.1} parent=0 // loop_header
    %s9 = sphi 0, %s13
    %p10 = scmp.ge.s32.totalorder %s9, 4
    %s16 = sphi 0, %s28
    %s17 = sphi 0, %s24
    %s18 = sphi 0, %s16
    %s19 = sphi 0, %s17
    %s20 = sphi 0, %s18
    %s21 = sphi 0, %s19
    %s31 = sphi 0, %s33
    %s34 = sphi 0, %s31
    %s35 = sphi 0, %s34
    %s51 = sphi 0, %s35
    %s57 = sphi 0, %s59
    %s60 = sphi 0, %s57
    %s61 = sphi 0, %s60
    %s77 = sphi 0, %s61
    %s83 = sphi 0, %s85
    %s86 = sphi 0, %s83
    %s87 = sphi 0, %s86
    %s103 = sphi 0, %s87
    %s111 = sphi 0, %s113
    %s114 = sphi 0, %s111
    %s115 = sphi 0, %s114
    %s131 = sphi 0, %s115
  $region4: #{downsample_conv.1} parent=0 // loop_header_branch
    %12 = sbr.rel (%p10) target = $region8
  $region5: #{downsample_conv.1} parent=0 // loop_body
    %s14 = ssub.s32 %s9, 1
    %s15 = ssub.s32 %s9, 2
    %s22 = sadd.s32 1, %s17
    %p23 = scmp.ge.s32.totalorder %s22, 1
    %s24 = scalar_select %p23, 0, %s22
    %s25 = sadd.s32 1, %s16
    %s26 = scalar_select %p23, %s25, %s16
    %p27 = scmp.ge.s32.totalorder %s26, 2
    %s28 = scalar_select %p27, 0, %s26
    %s29 = ssub.s32 %s16, %s28
    %p30 = scmp.eq.s32.totalorder %s29, 0
    %s32 = sadd.s32 %s31, 1
    %s33 = scalar_select %p30, %s31, %s32
    %p36 = pneg %p30
    %p37 = scmp.eq.s32.totalorder %s9, 1
    %p38 = por %p36, %p37
    %p39 = scmp.ne.s32.totalorder %s31, %s34
    %p40 = scmp.eq.s32.totalorder %s9, 0
    %p41 = por %p39, %p40
    %p42 = scmp.ne.s32.totalorder %s31, %s34
    %p43 = scmp.eq.s32.totalorder %s14, 1
    %p44 = por %p42, %p43
    %p45 = scmp.ne.s32.totalorder %s34, %s35
    %p46 = scmp.eq.s32.totalorder %s14, 0
    %p47 = por %p45, %p46
    %p48 = scmp.ne.s32.totalorder %s34, %s35
    %p49 = scmp.eq.s32.totalorder %s15, 1
    %p50 = por %p48, %p49
    %p52 = scmp.ne.s32.totalorder %s35, %s51
    %p53 = scmp.eq.s32.totalorder %s15, 0
    %p54 = por %p52, %p53
    %s55 = ssub.s32 %s17, %s24
    %p56 = scmp.eq.s32.totalorder %s55, 0
    %s58 = sadd.s32 %s57, 1
    %s59 = scalar_select %p56, %s57, %s58
    %p62 = pneg %p56
    %p63 = scmp.eq.s32.totalorder %s9, 1
    %p64 = por %p62, %p63
    %p65 = scmp.ne.s32.totalorder %s57, %s60
    %p66 = scmp.eq.s32.totalorder %s9, 0
    %p67 = por %p65, %p66
    %p68 = scmp.ne.s32.totalorder %s57, %s60
    %p69 = scmp.eq.s32.totalorder %s14, 1
    %p70 = por %p68, %p69
    %p71 = scmp.ne.s32.totalorder %s60, %s61
    %p72 = scmp.eq.s32.totalorder %s14, 0
    %p73 = por %p71, %p72
    %p74 = scmp.ne.s32.totalorder %s60, %s61
    %p75 = scmp.eq.s32.totalorder %s15, 1
    %p76 = por %p74, %p75
    %p78 = scmp.ne.s32.totalorder %s61, %s77
    %p79 = scmp.eq.s32.totalorder %s15, 0
    %p80 = por %p78, %p79
    %s81 = ssub.s32 %s17, %s24
    %p82 = scmp.eq.s32.totalorder %s81, 0
    %s84 = sadd.s32 %s83, 1
    %s85 = scalar_select %p82, %s83, %s84
    %p88 = pneg %p82
    %p89 = scmp.eq.s32.totalorder %s9, 1
    %p90 = por %p88, %p89
    %p91 = scmp.ne.s32.totalorder %s83, %s86
    %p92 = scmp.eq.s32.totalorder %s9, 0
    %p93 = por %p91, %p92
    %p94 = scmp.ne.s32.totalorder %s83, %s86
    %p95 = scmp.eq.s32.totalorder %s14, 1
    %p96 = por %p94, %p95
    %p97 = scmp.ne.s32.totalorder %s86, %s87
    %p98 = scmp.eq.s32.totalorder %s14, 0
    %p99 = por %p97, %p98
    %p100 = scmp.ne.s32.totalorder %s86, %s87
    %p101 = scmp.eq.s32.totalorder %s15, 1
    %p102 = por %p100, %p101
    %p104 = scmp.ne.s32.totalorder %s87, %s103
    %p105 = scmp.eq.s32.totalorder %s15, 0
    %p106 = por %p104, %p105
    %s107 = ssub.s32 %s16, %s28
    %s108 = ssub.s32 %s17, %s24
    %s109 = sor.u32 %s107, %s108
    %p110 = scmp.eq.s32.totalorder %s109, 0
    %s112 = sadd.s32 %s111, 1
    %s113 = scalar_select %p110, %s111, %s112
    %p116 = pneg %p110
    %p117 = scmp.eq.s32.totalorder %s9, 1
    %p118 = por %p116, %p117
    %p119 = scmp.ne.s32.totalorder %s111, %s114
    %p120 = scmp.eq.s32.totalorder %s9, 0
    %p121 = por %p119, %p120
    %p122 = scmp.ne.s32.totalorder %s111, %s114
    %p123 = scmp.eq.s32.totalorder %s14, 1
    %p124 = por %p122, %p123
    %p125 = scmp.ne.s32.totalorder %s114, %s115
    %p126 = scmp.eq.s32.totalorder %s14, 0
    %p127 = por %p125, %p126
    %p128 = scmp.ne.s32.totalorder %s114, %s115
    %p129 = scmp.eq.s32.totalorder %s15, 1
    %p130 = por %p128, %p129
    %p132 = scmp.ne.s32.totalorder %s115, %s131
    %p133 = scmp.eq.s32.totalorder %s15, 0
    %p134 = por %p132, %p133
    %p135 = scmp.le.s32.totalorder 1, %s9
    %p136 = scmp.lt.s32.totalorder %s9, 3
    %p137 = pnand %p135, %p136
    %p138 = pneg %p137
    // Predicated region
    $region9: #{downsample_conv.1} parent=5 // pred_check
      _
    $region10: #{downsample_conv.1} parent=5 // pred_check_branch
      %140 = sbr.rel (%p137) target = $region12
    $region11: #{downsample_conv.1} parent=5 // pred_region
      %s141 = ssub.s32 %s9, 1
      // Predicated region
      $region13: #{downsample_conv.1} parent=11 // pred_check
        %p142 = pneg %p73
      $region14: #{downsample_conv.1} parent=11 // pred_check_branch
        %144 = sbr.rel (%p142) target = $region16
      $region15: #{downsample_conv.1} parent=11 // pred_region
        %p145 = scmp.lt.s32.totalorder %s19, 0
        %s146 = scalar_select %p145, %s19, 0
        %s147 = smul.addr %s146, 8
        %s148 = scalar_lea.vmem %s1, %s147
      $region16: #{downsample_conv.1} parent=11 // pred_fallthru
        _
      // Predicated region
      $region17: #{downsample_conv.1} parent=11 // pred_check
        %p149 = pneg %p99
      $region18: #{downsample_conv.1} parent=11 // pred_check_branch
        %151 = sbr.rel (%p149) target = $region20
      $region19: #{downsample_conv.1} parent=11 // pred_region
        %p152 = scmp.lt.s32.totalorder %s19, 0
        %s153 = scalar_select %p152, %s19, 0
        %s154 = scalar_lea.vmem %s2, %s153
      $region20: #{downsample_conv.1} parent=11 // pred_fallthru
        _
    $region12: #{downsample_conv.1} parent=5 // pred_fallthru
      _
    %p155 = scmp.lt.s32.totalorder %s9, 2
    // Predicated region
    $region21: #{downsample_conv.1} parent=5 // pred_check
      %p156 = pneg %p155
    $region22: #{downsample_conv.1} parent=5 // pred_check_branch
      %158 = sbr.rel (%p156) target = $region24
    $region23: #{downsample_conv.1} parent=5 // pred_region
      // Predicated region
      $region25: #{downsample_conv.1} parent=23 // pred_check
        %p159 = pneg %p41
      $region26: #{downsample_conv.1} parent=23 // pred_check_branch
        %161 = sbr.rel (%p159) target = $region28
      $region27: #{downsample_conv.1} parent=23 // pred_region
        %p162 = scmp.lt.s32.totalorder %s16, 1
        %s163 = scalar_select %p162, %s16, 1
        %s164 = smul.addr %s163, 18
        %s165 = smul.addr %s164, 8
        %s166 = scalar_lea.vmem %s0, %s165
      $region28: #{downsample_conv.1} parent=23 // pred_fallthru
        _
    $region24: #{downsample_conv.1} parent=5 // pred_fallthru
      _
    %p167 = scmp.le.s32.totalorder 1, %s9
    %p168 = scmp.lt.s32.totalorder %s9, 3
    %p169 = pnand %p167, %p168
    %p170 = pneg %p169
    // Predicated region
    $region29: #{downsample_conv.1} parent=5 // pred_check
      _
    $region30: #{downsample_conv.1} parent=5 // pred_check_branch
      %172 = sbr.rel (%p169) target = $region32
    $region31: #{downsample_conv.1} parent=5 // pred_region
      %s173 = ssub.s32 %s9, 1
      %p174 = scmp.lt.s32.totalorder %s18, 1
      %s175 = scalar_select %p174, %s18, 1
      %s176 = smul.addr %s175, 18
      %s177 = smul.addr %s176, 8
      %s178 = scalar_lea.vmem %s0, %s177
      %p179 = pneg %p47
      %p180 = pneg %p44
      %p181 = scmp.lt.s32.totalorder %s19, 0
      %s182 = scalar_select %p181, %s19, 0
      %s183 = smul.addr %s182, 8
      %s184 = scalar_lea.vmem %s1, %s183
      %p185 = pneg %p73
      %p186 = pneg %p70
      %p187 = scmp.lt.s32.totalorder %s19, 0
      %s188 = scalar_select %p187, %s19, 0
      %s189 = scalar_lea.vmem %s2, %s188
      %p190 = pneg %p99
      %p191 = pneg %p96
      %p192 = pneg %p127
      %p193 = pneg %p124
      %p194 = scmp.lt.s32.totalorder %s18, 1
      %s195 = scalar_select %p194, %s18, 1
      %p196 = scmp.lt.s32.totalorder %s19, 0
      %s197 = scalar_select %p196, %s19, 0
      %s198 = smul.addr %s195, 8
      %s199 = sadd.s32 %s197, %s198
      %s200 = smul.addr %s199, 8
      %s201 = scalar_lea.vmem %s3, %s200
      %p202 = scmp.lt.s32.totalorder %s18, 1
      %s203 = scalar_select %p202, %s18, 1
      %s204 = smul.addr %s203, 18
      %s205 = smul.addr %s204, 8
      %s206 = scalar_lea.vmem %s0, %s205
      %p207 = scmp.lt.s32.totalorder %s19, 0
      %s208 = scalar_select %p207, %s19, 0
      %s209 = smul.addr %s208, 8
      %s210 = scalar_lea.vmem %s1, %s209
      %p211 = scmp.lt.s32.totalorder %s19, 0
      %s212 = scalar_select %p211, %s19, 0
      %s213 = scalar_lea.vmem %s2, %s212
      %p214 = scmp.lt.s32.totalorder %s18, 1
      %s215 = scalar_select %p214, %s18, 1
      %p216 = scmp.lt.s32.totalorder %s19, 0
      %s217 = scalar_select %p216, %s19, 0
      %s218 = smul.addr %s215, 8
      %s219 = sadd.s32 %s217, %s218
      %s220 = smul.addr %s219, 8
      %s221 = scalar_lea.vmem %s3, %s220
      %v222 = vld [vmem:[%s213] sm:$0x1]
      %v224 = vperm.slane %v222, 0
      %v226 = vld [vmem:[%s206] sm:$0xff]
      %v227 = vld [vmem:[%s206 + $0x10] sm:$0xff]
      %v228 = vld [vmem:[%s206 + $0x20] sm:$0xff]
      %v229 = vld [vmem:[%s206 + $0x30] sm:$0xff]
      %v230 = vld [vmem:[%s206 + $0x40] sm:$0xff]
      %v231 = vld [vmem:[%s206 + $0x50] sm:$0xff]
      %v232 = vld [vmem:[%s206 + $0x60] sm:$0xff]
      %v233 = vld [vmem:[%s206 + $0x70] sm:$0xff]
      %v234 = vld [vmem:[%s210] sm:$0xff]
      %v235 = vld [vmem:[%s210 + $0x8] sm:$0xff]
      %vm236 = vcmask 130048
      %v238 = vsel %vm236, %v226, 0
      %v241 = vsel %vm236, %v227, 0
      %v244 = vsel %vm236, %v228, 0
      %v247 = vsel %vm236, %v229, 0
      %v250 = vsel %vm236, %v230, 0
      %v253 = vsel %vm236, %v231, 0
      %v256 = vsel %vm236, %v232, 0
      %v259 = vsel %vm236, %v233, 0
      %261 = vmatpush.msra.mxu0 0.0
      %262 = vmatpush.msra.mxu0 0.0
      %263 = vmatpush.msra.mxu0 0.0
      %264 = vmatpush.msra.mxu0 0.0
      %265 = vmatpush.msra.mxu0 0.0
      %266 = vmatpush.msra.mxu0 0.0
      %267 = vmatpush.msra.mxu0 0.0
      %268 = vmatpush.msra.mxu0 0.0
      %269 = vmatpush.msra.mxu0 0.0
      %270 = vmatpush.msra.mxu0 0.0
      %271 = vmatpush.msra.mxu0 0.0
      %272 = vmatpush.msra.mxu0 0.0
      %273 = vmatpush.msra.mxu0 0.0
      %274 = vmatpush.msra.mxu0 0.0
      %275 = vmatpush.msra.mxu0 %v235
      %276 = vmatpush.msra.mxu0 %v234
      %277 = vmatmul.f32.gmra.mxu0 %v238
      %v278 = vpop.f32.mrf.mxu0
      %v279 = vadd.f32 0.0, %v278
      %280 = vmatmul.f32.gmra.mxu0 %v241
      %v281 = vpop.f32.mrf.mxu0
      %v282 = vadd.f32 0.0, %v281
      %283 = vmatmul.f32.gmra.mxu0 %v244
      %v284 = vpop.f32.mrf.mxu0
      %v285 = vadd.f32 0.0, %v284
      %286 = vmatmul.f32.gmra.mxu0 %v247
      %v287 = vpop.f32.mrf.mxu0
      %v288 = vadd.f32 0.0, %v287
      %289 = vmatmul.f32.gmra.mxu0 %v250
      %v290 = vpop.f32.mrf.mxu0
      %v291 = vadd.f32 0.0, %v290
      %292 = vmatmul.f32.gmra.mxu0 %v253
      %v293 = vpop.f32.mrf.mxu0
      %v294 = vadd.f32 0.0, %v293
      %295 = vmatmul.f32.gmra.mxu0 %v256
      %v296 = vpop.f32.mrf.mxu0
      %v297 = vadd.f32 0.0, %v296
      %298 = vmatmul.f32.gmra.mxu0 %v259
      %v299 = vpop.f32.mrf.mxu0
      %v300 = vadd.f32 0.0, %v299
      %301 = vdwg.mxu0
      %v302 = vadd.f32 %v224, %v279
      %v303 = vadd.f32 %v224, %v282
      %v304 = vadd.f32 %v224, %v285
      %v305 = vadd.f32 %v224, %v288
      %v306 = vadd.f32 %v224, %v291
      %v307 = vadd.f32 %v224, %v294
      %v308 = vadd.f32 %v224, %v297
      %v309 = vadd.f32 %v224, %v300
      %v310 = vld [vmem:[%s206 + $0x1] sm:$0xff]
      %v311 = vld [vmem:[%s206 + $0x11] sm:$0xff]
      %v312 = vld [vmem:[%s206 + $0x21] sm:$0xff]
      %v313 = vld [vmem:[%s206 + $0x31] sm:$0xff]
      %v314 = vld [vmem:[%s206 + $0x41] sm:$0xff]
      %v315 = vld [vmem:[%s206 + $0x51] sm:$0xff]
      %v316 = vld [vmem:[%s206 + $0x61] sm:$0xff]
      %v317 = vld [vmem:[%s206 + $0x71] sm:$0xff]
      %s318 = scalar_lea.vmem %s210, 16
      %v319 = vld [vmem:[%s318] sm:$0xff]
      %v320 = vld [vmem:[%s318 + $0x8] sm:$0xff]
      %v322 = vsel %vm236, %v310, 0
      %v325 = vsel %vm236, %v311, 0
      %v328 = vsel %vm236, %v312, 0
      %v331 = vsel %vm236, %v313, 0
      %v334 = vsel %vm236, %v314, 0
      %v337 = vsel %vm236, %v315, 0
      %v340 = vsel %vm236, %v316, 0
      %v343 = vsel %vm236, %v317, 0
      %345 = vmatpush.msra.mxu0 0.0
      %346 = vmatpush.msra.mxu0 0.0
      %347 = vmatpush.msra.mxu0 0.0
      %348 = vmatpush.msra.mxu0 0.0
      %349 = vmatpush.msra.mxu0 0.0
      %350 = vmatpush.msra.mxu0 0.0
      %351 = vmatpush.msra.mxu0 0.0
      %352 = vmatpush.msra.mxu0 0.0
      %353 = vmatpush.msra.mxu0 0.0
      %354 = vmatpush.msra.mxu0 0.0
      %355 = vmatpush.msra.mxu0 0.0
      %356 = vmatpush.msra.mxu0 0.0
      %357 = vmatpush.msra.mxu0 0.0
      %358 = vmatpush.msra.mxu0 0.0
      %359 = vmatpush.msra.mxu0 %v320
      %360 = vmatpush.msra.mxu0 %v319
      %361 = vmatmul.f32.gmra.mxu0 %v322
      %v362 = vpop.f32.mrf.mxu0
      %v363 = vadd.f32 0.0, %v362
      %364 = vmatmul.f32.gmra.mxu0 %v325
      %v365 = vpop.f32.mrf.mxu0
      %v366 = vadd.f32 0.0, %v365
      %367 = vmatmul.f32.gmra.mxu0 %v328
      %v368 = vpop.f32.mrf.mxu0
      %v369 = vadd.f32 0.0, %v368
      %370 = vmatmul.f32.gmra.mxu0 %v331
      %v371 = vpop.f32.mrf.mxu0
      %v372 = vadd.f32 0.0, %v371
      %373 = vmatmul.f32.gmra.mxu0 %v334
      %v374 = vpop.f32.mrf.mxu0
      %v375 = vadd.f32 0.0, %v374
      %376 = vmatmul.f32.gmra.mxu0 %v337
      %v377 = vpop.f32.mrf.mxu0
      %v378 = vadd.f32 0.0, %v377
      %379 = vmatmul.f32.gmra.mxu0 %v340
      %v380 = vpop.f32.mrf.mxu0
      %v381 = vadd.f32 0.0, %v380
      %382 = vmatmul.f32.gmra.mxu0 %v343
      %v383 = vpop.f32.mrf.mxu0
      %v384 = vadd.f32 0.0, %v383
      %385 = vdwg.mxu0
      %v386 = vadd.f32 %v302, %v363
      %v387 = vadd.f32 %v303, %v366
      %v388 = vadd.f32 %v304, %v369
      %v389 = vadd.f32 %v305, %v372
      %v390 = vadd.f32 %v306, %v375
      %v391 = vadd.f32 %v307, %v378
      %v392 = vadd.f32 %v308, %v381
      %v393 = vadd.f32 %v309, %v384
      %s394 = scalar_lea.vmem %s206, 16
      %v395 = vld [vmem:[%s394] sm:$0xff]
      %v396 = vld [vmem:[%s394 + $0x10] sm:$0xff]
      %v397 = vld [vmem:[%s394 + $0x20] sm:$0xff]
      %v398 = vld [vmem:[%s394 + $0x30] sm:$0xff]
      %v399 = vld [vmem:[%s394 + $0x40] sm:$0xff]
      %v400 = vld [vmem:[%s394 + $0x50] sm:$0xff]
      %v401 = vld [vmem:[%s394 + $0x60] sm:$0xff]
      %v402 = vld [vmem:[%s394 + $0x70] sm:$0xff]
      %s403 = scalar_lea.vmem %s210, 32
      %v404 = vld [vmem:[%s403] sm:$0xff]
      %vm405 = vcmask 64512
      %v407 = vsel %vm405, %v395, 0
      %v410 = vsel %vm405, %v396, 0
      %v413 = vsel %vm405, %v397, 0
      %v416 = vsel %vm405, %v398, 0
      %v419 = vsel %vm405, %v399, 0
      %v422 = vsel %vm405, %v400, 0
      %v425 = vsel %vm405, %v401, 0
      %v428 = vsel %vm405, %v402, 0
      %430 = vmatpush.msra.mxu0 0.0
      %431 = vmatpush.msra.mxu0 0.0
      %432 = vmatpush.msra.mxu0 0.0
      %433 = vmatpush.msra.mxu0 0.0
      %434 = vmatpush.msra.mxu0 0.0
      %435 = vmatpush.msra.mxu0 0.0
      %436 = vmatpush.msra.mxu0 0.0
      %437 = vmatpush.msra.mxu0 0.0
      %438 = vmatpush.msra.mxu0 0.0
      %439 = vmatpush.msra.mxu0 0.0
      %440 = vmatpush.msra.mxu0 0.0
      %441 = vmatpush.msra.mxu0 0.0
      %442 = vmatpush.msra.mxu0 0.0
      %443 = vmatpush.msra.mxu0 0.0
      %444 = vmatpush.msra.mxu0 0.0
      %445 = vmatpush.msra.mxu0 %v404
      %446 = vmatmul.f32.gmra.mxu0 %v407
      %v447 = vpop.f32.mrf.mxu0
      %v448 = vadd.f32 0.0, %v447
      %449 = vmatmul.f32.gmra.mxu0 %v410
      %v450 = vpop.f32.mrf.mxu0
      %v451 = vadd.f32 0.0, %v450
      %452 = vmatmul.f32.gmra.mxu0 %v413
      %v453 = vpop.f32.mrf.mxu0
      %v454 = vadd.f32 0.0, %v453
      %455 = vmatmul.f32.gmra.mxu0 %v416
      %v456 = vpop.f32.mrf.mxu0
      %v457 = vadd.f32 0.0, %v456
      %458 = vmatmul.f32.gmra.mxu0 %v419
      %v459 = vpop.f32.mrf.mxu0
      %v460 = vadd.f32 0.0, %v459
      %461 = vmatmul.f32.gmra.mxu0 %v422
      %v462 = vpop.f32.mrf.mxu0
      %v463 = vadd.f32 0.0, %v462
      %464 = vmatmul.f32.gmra.mxu0 %v425
      %v465 = vpop.f32.mrf.mxu0
      %v466 = vadd.f32 0.0, %v465
      %467 = vmatmul.f32.gmra.mxu0 %v428
      %v468 = vpop.f32.mrf.mxu0
      %v469 = vadd.f32 0.0, %v468
      %470 = vdwg.mxu0
      %v471 = vadd.f32 %v386, %v448
      %v472 = vadd.f32 %v387, %v451
      %v473 = vadd.f32 %v388, %v454
      %v474 = vadd.f32 %v389, %v457
      %v475 = vadd.f32 %v390, %v460
      %v476 = vadd.f32 %v391, %v463
      %v477 = vadd.f32 %v392, %v466
      %v478 = vadd.f32 %v393, %v469
      %v479 = vld [vmem:[%s394 + $0x1] sm:$0xff]
      %v480 = vld [vmem:[%s394 + $0x11] sm:$0xff]
      %v481 = vld [vmem:[%s394 + $0x21] sm:$0xff]
      %v482 = vld [vmem:[%s394 + $0x31] sm:$0xff]
      %v483 = vld [vmem:[%s394 + $0x41] sm:$0xff]
      %v484 = vld [vmem:[%s394 + $0x51] sm:$0xff]
      %v485 = vld [vmem:[%s394 + $0x61] sm:$0xff]
      %v486 = vld [vmem:[%s394 + $0x71] sm:$0xff]
      %s487 = scalar_lea.vmem %s210, 48
      %v488 = vld [vmem:[%s487] sm:$0xf]
      %vm489 = vcmask 31744
      %v491 = vsel %vm489, %v479, 0
      %v494 = vsel %vm489, %v480, 0
      %v497 = vsel %vm489, %v481, 0
      %v500 = vsel %vm489, %v482, 0
      %v503 = vsel %vm489, %v483, 0
      %v506 = vsel %vm489, %v484, 0
      %v509 = vsel %vm489, %v485, 0
      %v512 = vsel %vm489, %v486, 0
      %vm514 = vcmask 1043456
      %v516 = vsel %vm514, %v488, 0
      %518 = vmatpush.msra.mxu0 0.0
      %519 = vmatpush.msra.mxu0 0.0
      %520 = vmatpush.msra.mxu0 0.0
      %521 = vmatpush.msra.mxu0 0.0
      %522 = vmatpush.msra.mxu0 0.0
      %523 = vmatpush.msra.mxu0 0.0
      %524 = vmatpush.msra.mxu0 0.0
      %525 = vmatpush.msra.mxu0 0.0
      %526 = vmatpush.msra.mxu0 0.0
      %527 = vmatpush.msra.mxu0 0.0
      %528 = vmatpush.msra.mxu0 0.0
      %529 = vmatpush.msra.mxu0 0.0
      %530 = vmatpush.msra.mxu0 0.0
      %531 = vmatpush.msra.mxu0 0.0
      %532 = vmatpush.msra.mxu0 0.0
      %533 = vmatpush.msra.mxu0 %v516
      %534 = vmatmul.f32.gmra.mxu0 %v491
      %v535 = vpop.f32.mrf.mxu0
      %v536 = vadd.f32 0.0, %v535
      %537 = vmatmul.f32.gmra.mxu0 %v494
      %v538 = vpop.f32.mrf.mxu0
      %v539 = vadd.f32 0.0, %v538
      %540 = vmatmul.f32.gmra.mxu0 %v497
      %v541 = vpop.f32.mrf.mxu0
      %v542 = vadd.f32 0.0, %v541
      %543 = vmatmul.f32.gmra.mxu0 %v500
      %v544 = vpop.f32.mrf.mxu0
      %v545 = vadd.f32 0.0, %v544
      %546 = vmatmul.f32.gmra.mxu0 %v503
      %v547 = vpop.f32.mrf.mxu0
      %v548 = vadd.f32 0.0, %v547
      %549 = vmatmul.f32.gmra.mxu0 %v506
      %v550 = vpop.f32.mrf.mxu0
      %v551 = vadd.f32 0.0, %v550
      %552 = vmatmul.f32.gmra.mxu0 %v509
      %v553 = vpop.f32.mrf.mxu0
      %v554 = vadd.f32 0.0, %v553
      %555 = vmatmul.f32.gmra.mxu0 %v512
      %v556 = vpop.f32.mrf.mxu0
      %v557 = vadd.f32 0.0, %v556
      %558 = vdwg.mxu0
      %v559 = vadd.f32 %v471, %v536
      %v560 = vadd.f32 %v472, %v539
      %v561 = vadd.f32 %v473, %v542
      %v562 = vadd.f32 %v474, %v545
      %v563 = vadd.f32 %v475, %v548
      %v564 = vadd.f32 %v476, %v551
      %v565 = vadd.f32 %v477, %v554
      %v566 = vadd.f32 %v478, %v557
      %567 = vst [vmem:[%s221] sm:$0xff] %v559
      %568 = vst [vmem:[%s221 + $0x8] sm:$0xff] %v560
      %569 = vst [vmem:[%s221 + $0x10] sm:$0xff] %v561
      %570 = vst [vmem:[%s221 + $0x18] sm:$0xff] %v562
      %571 = vst [vmem:[%s221 + $0x20] sm:$0xff] %v563
      %572 = vst [vmem:[%s221 + $0x28] sm:$0xff] %v564
      %573 = vst [vmem:[%s221 + $0x30] sm:$0xff] %v565
      %574 = vst [vmem:[%s221 + $0x38] sm:$0xff] %v566
      %p575 = scmp.lt.s32.totalorder %s18, 1
      %s576 = scalar_select %p575, %s18, 1
      %p577 = scmp.lt.s32.totalorder %s19, 0
      %s578 = scalar_select %p577, %s19, 0
      %s579 = smul.addr %s576, 8
      %s580 = sadd.s32 %s578, %s579
      %s581 = smul.addr %s580, 8
      %s582 = scalar_lea.vmem %s3, %s581
      // Predicated region
      $region33: #{downsample_conv.1} parent=31 // pred_check
        %p583 = pneg %p124
      $region34: #{downsample_conv.1} parent=31 // pred_check_branch
        %585 = sbr.rel (%p583) target = $region36
      $region35: #{downsample_conv.1} parent=31 // pred_region
        _
      $region36: #{downsample_conv.1} parent=31 // pred_fallthru
        _
    $region32: #{downsample_conv.1} parent=5 // pred_fallthru
      _
    %p586 = scmp.le.s32.totalorder 2, %s9
    // Predicated region
    $region37: #{downsample_conv.1} parent=5 // pred_check
      %p587 = pneg %p586
    $region38: #{downsample_conv.1} parent=5 // pred_check_branch
      %589 = sbr.rel (%p587) target = $region40
    $region39: #{downsample_conv.1} parent=5 // pred_region
      %s590 = ssub.s32 %s9, 2
      // Predicated region
      $region41: #{downsample_conv.1} parent=39 // pred_check
        %p591 = pneg %p130
      $region42: #{downsample_conv.1} parent=39 // pred_check_branch
        %593 = sbr.rel (%p591) target = $region44
      $region43: #{downsample_conv.1} parent=39 // pred_region
        %p594 = scmp.lt.s32.totalorder %s20, 1
        %s595 = scalar_select %p594, %s20, 1
        %p596 = scmp.lt.s32.totalorder %s21, 0
        %s597 = scalar_select %p596, %s21, 0
        %s598 = smul.addr %s595, 8
        %s599 = sadd.s32 %s597, %s598
        %s600 = smul.addr %s599, 8
        %s601 = scalar_lea.vmem %s3, %s600
      $region44: #{downsample_conv.1} parent=39 // pred_fallthru
        _
    $region40: #{downsample_conv.1} parent=5 // pred_fallthru
      _
  $region6: #{downsample_conv.1} parent=0 // loop_footer
    %s13 = sadd.s32 1, %s9
  $region7: #{downsample_conv.1} parent=0 // loop_footer_branch
    %8 = sbr.rel target = $region3
  $region8: #{downsample_conv.1} parent=0 // loop_exit
    _

</llo_original>
